<compile_context>
chip_gen: v7x
topology: tpu7x:2x2x1
jax: 0.10.0
libtpu: 0.0.40
codegen_flags: <defaults>
</compile_context>

<pallas_src>
import math

import jax
import jax.numpy as jnp
from jax.experimental import pallas as pl
from jax.experimental.pallas import tpu as pltpu

_BN_EPS = 1e-5


def _leaky_relu(x, slope=0.01):          # PyTorch default negative_slope
    return jnp.where(x > 0, x, slope * x)


def _softplus(x):
    # PyTorch Softplus (beta=1, threshold=20): x for x > 20, else log(1 + e^x)
    return jnp.where(x > 20.0, x, jnp.log1p(jnp.exp(jnp.minimum(x, 20.0))))


def _encoder_kernel(
    x_ref, w1_ref, b1_ref,
    w2_ref, b2_ref,
    w3m_ref, b3m_ref, w3v_ref, b3v_ref,
    mu_ref, var_ref,
    acc_ref,
):
    k = pl.program_id(1)

    @pl.when(k == 0)
    def _():
        acc_ref[...] = jnp.zeros_like(acc_ref)

    # Streamed fused first layer: (TM, TK) bf16 @ (TK, 128) bf16, f32 accum.
    acc_ref[...] += jnp.dot(
        x_ref[...], w1_ref[...], preferred_element_type=jnp.float32)

    @pl.when(k == pl.num_programs(1) - 1)
    def _():
        # Fused layer-1 activations: lanes [0:64] = mu branch, [64:128] = var.
        h1 = _leaky_relu(acc_ref[...] + b1_ref[...])            # (TM, 128) f32

        # Fused layer-2 (block-diagonal weight): one lane-dense 128x128 dot.
        h2 = _leaky_relu(
            jnp.dot(h1, w2_ref[...], preferred_element_type=jnp.float32)
            + b2_ref[...])                                      # (TM, 128) f32

        # Heads: zero-row-padded (128, latent) weights, no lane slicing needed.
        mu_ref[...] = (
            jnp.dot(h2, w3m_ref[...], preferred_element_type=jnp.float32)
            + b3m_ref[...])
        var_ref[...] = _softplus(
            jnp.dot(h2, w3v_ref[...], preferred_element_type=jnp.float32)
            + b3v_ref[...])


def fold_and_pack(params):
    """Fold eval-mode BatchNorm1d into each branch's first Linear and fuse the
    two (flat_dim, 64) weights into one bf16 (flat_dim, 128) weight."""
    def fold(gamma, beta, rmean, rvar, w, b):
        scale = gamma / jnp.sqrt(rvar + _BN_EPS)          # (flat_dim,)
        shift = beta - rmean * scale                      # (flat_dim,)
        w_eff = scale[:, None] * w                        # (flat_dim, 64)
        b_eff = b + (shift @ w)[None, :]                  # (1, 64)
        return w_eff, b_eff

    w1m_eff, b1m_eff = fold(params["gamma_m"], params["beta_m"],
                            params["rmean_m"], params["rvar_m"],
                            params["w1m"], params["b1m"])
    w1v_eff, b1v_eff = fold(params["gamma_v"], params["beta_v"],
                            params["rmean_v"], params["rvar_v"],
                            params["w1v"], params["b1v"])

    w1 = jnp.concatenate([w1m_eff, w1v_eff], axis=1).astype(jnp.bfloat16)
    b1 = jnp.concatenate([b1m_eff, b1v_eff], axis=1).astype(jnp.float32)
    return w1, b1


def pack_tail(params, latent_dim):
    """Block-structured tail weights (all f32, 128-lane dense)."""
    z = lambda r, c: jnp.zeros((r, c), jnp.float32)
    # Layer 2: h1 lanes [0:64] (mu) -> cols [0:64]; lanes [64:128] (var) ->
    # cols [64:96]; cols [96:128] are zero padding.
    top = jnp.concatenate([params["w2m"], z(64, 64)], axis=1)           # (64,128)
    bot = jnp.concatenate([z(64, 64), params["w2v"], z(64, 32)], axis=1)
    w2_blk = jnp.concatenate([top, bot], axis=0)                        # (128,128)
    b2_blk = jnp.concatenate(
        [params["b2m"], params["b2v"], z(1, 32)], axis=1)               # (1,128)
    # Heads: zero-row padding so the full (TM,128) h2 feeds each head directly.
    w3m_pad = jnp.concatenate([params["w3m"], z(64, latent_dim)], axis=0)
    w3v_pad = jnp.concatenate(
        [z(64, latent_dim), params["w3v"], z(32, latent_dim)], axis=0)
    return w2_blk, b2_blk, w3m_pad, w3v_pad


def mlp_encoder(x, params, latent_dim):
    B = x.shape[0]
    x2 = x.reshape(B, -1).astype(jnp.bfloat16)            # bf16 MXU input path
    flat_dim = x2.shape[1]

    w1, b1 = fold_and_pack(params)                         # (flat, 128) bf16
    w2_blk, b2_blk, w3m_pad, w3v_pad = pack_tail(params, latent_dim)

    # ---- tiling over the big reduction dim (flat_dim) and the batch ----
    tk = min(512, ((flat_dim + 127) // 128) * 128)         # lane-dense K tile
    padded = ((flat_dim + tk - 1) // tk) * tk
    if padded != flat_dim:                                 # zero-pad: no effect
        x2 = jnp.pad(x2, ((0, 0), (0, padded - flat_dim)))
        w1 = jnp.pad(w1, ((0, padded - flat_dim), (0, 0)))
    nk = padded // tk

    tm = B
    for cand in (512, 256, 128, 64, 32, 16, 8):
        if B % cand == 0:
            tm = cand
            break
    nm = B // tm

    const = lambda shape: pl.BlockSpec(shape, lambda i, k: (0, 0))

    z_mu, z_var = pl.pallas_call(
        _encoder_kernel,
        grid=(nm, nk),
        in_specs=[
            pl.BlockSpec((tm, tk), lambda i, k: (i, k)),       # x (streamed)
            pl.BlockSpec((tk, 128), lambda i, k: (k, 0)),      # fused W1 (bf16)
            const((1, 128)),                                   # fused b1
            const((128, 128)), const((1, 128)),                # W2 block, b2
            const((128, latent_dim)), const((1, latent_dim)),  # W3 mu head
            const((128, latent_dim)), const((1, latent_dim)),  # W3 var head
        ],
        out_specs=(
            pl.BlockSpec((tm, latent_dim), lambda i, k: (i, 0)),
            pl.BlockSpec((tm, latent_dim), lambda i, k: (i, 0)),
        ),
        out_shape=(
            jax.ShapeDtypeStruct((B, latent_dim), jnp.float32),
            jax.ShapeDtypeStruct((B, latent_dim), jnp.float32),
        ),
        scratch_shapes=[pltpu.VMEM((tm, 128), jnp.float32)],   # layer-1 accum
        compiler_params=pltpu.CompilerParams(
            dimension_semantics=("parallel", "arbitrary"),
            vmem_limit_bytes=32 * 1024 * 1024,
        ),
    )(
        x2, w1, b1,
        w2_blk, b2_blk,
        w3m_pad, params["b3m"], w3v_pad, params["b3v"],
    )
    return z_mu, z_var


def init_params(key, flat_dim, latent_dim):
    """Deterministic synthetic params (PyTorch-Linear-like scale + BN stats)."""
    def linear(k, fan_in, fan_out):
        kw, kb = jax.random.split(k)
        bound = 1.0 / math.sqrt(fan_in)
        w = jax.random.uniform(kw, (fan_in, fan_out), jnp.float32, -bound, bound)
        b = jax.random.uniform(kb, (1, fan_out), jnp.float32, -bound, bound)
        return w, b

    def bnorm(k, n):
        k1, k2, k3, k4 = jax.random.split(k, 4)
        gamma = jax.random.uniform(k1, (n,), jnp.float32, 0.5, 1.5)
        beta = 0.1 * jax.random.normal(k2, (n,), jnp.float32)
        rmean = 0.1 * jax.random.normal(k3, (n,), jnp.float32)
        rvar = jax.random.uniform(k4, (n,), jnp.float32, 0.5, 1.5)
        return gamma, beta, rmean, rvar

    keys = jax.random.split(key, 8)
    w1m, b1m = linear(keys[0], flat_dim, 64)
    w2m, b2m = linear(keys[1], 64, 64)
    w3m, b3m = linear(keys[2], 64, latent_dim)
    w1v, b1v = linear(keys[3], flat_dim, 64)
    w2v, b2v = linear(keys[4], 64, 32)
    w3v, b3v = linear(keys[5], 32, latent_dim)
    gm, bm, mm, vm = bnorm(keys[6], flat_dim)
    gv, bv, mv, vv = bnorm(keys[7], flat_dim)
    return dict(
        w1m=w1m, b1m=b1m, w2m=w2m, b2m=b2m, w3m=w3m, b3m=b3m,
        w1v=w1v, b1v=b1v, w2v=w2v, b2v=b2v, w3v=w3v, b3v=b3v,
        gamma_m=gm, beta_m=bm, rmean_m=mm, rvar_m=vm,
        gamma_v=gv, beta_v=bv, rmean_v=mv, rvar_v=vv,
    )


if __name__ == "__main__":
    input_shape = (4, 16, 16)            # (C, H, W)  -> flat_dim = 1024
    latent_dim = 8
    batch = 2
    flat_dim = 4 * 16 * 16

    key = jax.random.PRNGKey(0)
    kx, kp = jax.random.split(key)
    x = jax.random.normal(kx, (batch,) + input_shape, jnp.float32)
    params = init_params(kp, flat_dim, latent_dim)

    z_mu, z_var = mlp_encoder(x, params, latent_dim)
    jax.block_until_ready((z_mu, z_var))

    def lrelu(v):
        return jnp.where(v > 0, v, 0.01 * v)

    # Exact f32 eval-mode PyTorch reference.
    def torch_ref(x, p):
        xf = x.reshape(x.shape[0], -1)

        def bn(v, g, b, m, s2):
            return (v - m) / jnp.sqrt(s2 + _BN_EPS) * g + b

        xm = bn(xf, p["gamma_m"], p["beta_m"], p["rmean_m"], p["rvar_m"])
        h = lrelu(xm @ p["w1m"] + p["b1m"])
        h = lrelu(h @ p["w2m"] + p["b2m"])
        mu = h @ p["w3m"] + p["b3m"]
        xv = bn(xf, p["gamma_v"], p["beta_v"], p["rmean_v"], p["rvar_v"])
        g = lrelu(xv @ p["w1v"] + p["b1v"])
        g = lrelu(g @ p["w2v"] + p["b2v"])
        var = jax.nn.softplus(g @ p["w3v"] + p["b3v"])
        return mu, var

    # Reference mirroring the kernel's BN-fold + bf16 layer-1 (tight check).
    def mirrored_ref(x, p):
        xf = x.reshape(x.shape[0], -1)
        w1, b1 = fold_and_pack(p)
        h1 = jnp.dot(xf.astype(jnp.bfloat16), w1,
                     preferred_element_type=jnp.float32) + b1
        h1 = lrelu(h1)
        hm, gv = h1[:, :64], h1[:, 64:]
        h = lrelu(hm @ p["w2m"] + p["b2m"])
        mu = h @ p["w3m"] + p["b3m"]
        g = lrelu(gv @ p["w2v"] + p["b2v"])
        var = jax.nn.softplus(g @ p["w3v"] + p["b3v"])
        return mu, var

    mu_m, var_m = mirrored_ref(x, params)
    mu_t, var_t = torch_ref(x, params)

    assert z_mu.shape == (batch, latent_dim)
    assert z_var.shape == (batch, latent_dim)
    assert jnp.all(z_var >= 0)
    # Tight: same math as the kernel (bf16 first layer, f32 elsewhere).
    assert jnp.allclose(z_mu, mu_m, atol=2e-2, rtol=2e-2)
    assert jnp.allclose(z_var, var_m, atol=2e-2, rtol=2e-2)
    # Loose: bf16 quantization vs exact f32 PyTorch semantics.
    assert jnp.allclose(z_mu, mu_t, atol=1e-1, rtol=5e-2)
    assert jnp.allclose(z_var, var_t, atol=1e-1, rtol=5e-2)

    print("KERNEL_OK")
</pallas_src>

<mosaic_0001>
module attributes {stable_mosaic.version = 11 : i64} {
  func.func @_encoder_kernel(%arg0: i32, %arg1: i32, %arg2: memref<2x512xbf16, #tpu.memory_space<vmem>>, %arg3: memref<512x128xbf16, #tpu.memory_space<vmem>>, %arg4: memref<1x128xf32, #tpu.memory_space<vmem>>, %arg5: memref<128x128xf32, #tpu.memory_space<vmem>>, %arg6: memref<1x128xf32, #tpu.memory_space<vmem>>, %arg7: memref<128x8xf32, #tpu.memory_space<vmem>>, %arg8: memref<1x8xf32, #tpu.memory_space<vmem>>, %arg9: memref<128x8xf32, #tpu.memory_space<vmem>>, %arg10: memref<1x8xf32, #tpu.memory_space<vmem>>, %arg11: memref<2x8xf32, #tpu.memory_space<vmem>>, %arg12: memref<2x8xf32, #tpu.memory_space<vmem>>, %arg13: memref<2x128xf32, #tpu.memory_space<vmem>>) attributes {dimension_semantics = [#tpu.dimension_semantics<parallel>, #tpu.dimension_semantics<arbitrary>], iteration_bounds = array<i64: 1, 2>, scalar_prefetch = 0 : i64, scratch_operands = 1 : i64, tpu.core_type = #tpu.core_type<tc>, window_params = [{transform_indices = @transform_0, window_bounds = array<i64: 2, 512>}, {transform_indices = @transform_1, window_bounds = array<i64: 512, 128>}, {pipeline_mode = #tpu.pipeline_mode<synchronous>, transform_indices = @transform_2, window_bounds = array<i64: 1, 128>}, {pipeline_mode = #tpu.pipeline_mode<synchronous>, transform_indices = @transform_3, window_bounds = array<i64: 128, 128>}, {pipeline_mode = #tpu.pipeline_mode<synchronous>, transform_indices = @transform_4, window_bounds = array<i64: 1, 128>}, {pipeline_mode = #tpu.pipeline_mode<synchronous>, transform_indices = @transform_5, window_bounds = array<i64: 128, 8>}, {pipeline_mode = #tpu.pipeline_mode<synchronous>, transform_indices = @transform_6, window_bounds = array<i64: 1, 8>}, {pipeline_mode = #tpu.pipeline_mode<synchronous>, transform_indices = @transform_7, window_bounds = array<i64: 128, 8>}, {pipeline_mode = #tpu.pipeline_mode<synchronous>, transform_indices = @transform_8, window_bounds = array<i64: 1, 8>}, {transform_indices = @transform_9, window_bounds = array<i64: 2, 8>}, {transform_indices = @transform_10, window_bounds = array<i64: 2, 8>}]} {
    %c0_i32 = arith.constant 0 : i32
    %0 = arith.cmpi eq, %arg1, %c0_i32 : i32
    %1 = arith.extui %0 : i1 to i32
    %c0_i32_0 = arith.constant 0 : i32
    %2 = arith.cmpi ne, %1, %c0_i32_0 : i32
    scf.if %2 {
      %cst_9 = arith.constant 0.000000e+00 : f32
      %12 = vector.broadcast %cst_9 : f32 to vector<2x128xf32>
      %c0_10 = arith.constant 0 : index
      %c0_11 = arith.constant 0 : index
      %13 = vector.load %arg13[%c0_10, %c0_11] : memref<2x128xf32, #tpu.memory_space<vmem>>, vector<2x128xf32>
      tpu.vector_store %arg13[%c0_10, %c0_11], %12 {strides = array<i32>} : memref<2x128xf32, #tpu.memory_space<vmem>>, vector<2x128xf32>,
    } else {
    }
    %c0 = arith.constant 0 : index
    %c0_1 = arith.constant 0 : index
    %3 = vector.load %arg13[%c0, %c0_1] : memref<2x128xf32, #tpu.memory_space<vmem>>, vector<2x128xf32>
    %c0_2 = arith.constant 0 : index
    %c0_3 = arith.constant 0 : index
    %4 = vector.load %arg2[%c0_2, %c0_3] : memref<2x512xbf16, #tpu.memory_space<vmem>>, vector<2x512xbf16>
    %c0_4 = arith.constant 0 : index
    %c0_5 = arith.constant 0 : index
    %5 = vector.load %arg3[%c0_4, %c0_5] : memref<512x128xbf16, #tpu.memory_space<vmem>>, vector<512x128xbf16>
    %cst = arith.constant dense<0.000000e+00> : vector<2x128xf32>
    %6 = tpu.matmul %4, %5, %cst {dimension_numbers = #tpu.dot_dimension_numbers<[1], [0], [0], [1], [0, 0, 1, 1], [], []>} : vector<2x512xbf16>, vector<512x128xbf16>, vector<2x128xf32> -> vector<2x128xf32>
    %7 = arith.addf %3, %6 : vector<2x128xf32>
    %c0_6 = arith.constant 0 : index
    %c0_7 = arith.constant 0 : index
    %8 = vector.load %arg13[%c0_6, %c0_7] : memref<2x128xf32, #tpu.memory_space<vmem>>, vector<2x128xf32>
    tpu.vector_store %arg13[%c0_6, %c0_7], %7 {strides = array<i32>} : memref<2x128xf32, #tpu.memory_space<vmem>>, vector<2x128xf32>,
    %c1_i32 = arith.constant 1 : i32
    %9 = arith.cmpi eq, %arg1, %c1_i32 : i32
    %10 = arith.extui %9 : i1 to i32
    %c0_i32_8 = arith.constant 0 : i32
    %11 = arith.cmpi ne, %10, %c0_i32_8 : i32
    scf.if %11 {
      %c0_9 = arith.constant 0 : index
      %c0_10 = arith.constant 0 : index
      %12 = vector.load %arg13[%c0_9, %c0_10] : memref<2x128xf32, #tpu.memory_space<vmem>>, vector<2x128xf32>
      %c0_11 = arith.constant 0 : index
      %c0_12 = arith.constant 0 : index
      %13 = vector.load %arg4[%c0_11, %c0_12] : memref<1x128xf32, #tpu.memory_space<vmem>>, vector<1x128xf32>
      %14 = vector.broadcast %13 : vector<1x128xf32> to vector<2x128xf32>
      %15 = arith.addf %12, %14 : vector<2x128xf32>
      %cst_13 = arith.constant 0.000000e+00 : f32
      %16 = vector.broadcast %cst_13 : f32 to vector<2x128xf32>
      %17 = arith.cmpf ogt, %15, %16 : vector<2x128xf32>
      %cst_14 = arith.constant 0.00999999977 : f32
      %18 = vector.broadcast %cst_14 : f32 to vector<2x128xf32>
      %19 = arith.mulf %18, %15 : vector<2x128xf32>
      %20 = arith.select %17, %15, %19 : vector<2x128xi1>, vector<2x128xf32>
      %c0_15 = arith.constant 0 : index
      %c0_16 = arith.constant 0 : index
      %21 = vector.load %arg5[%c0_15, %c0_16] : memref<128x128xf32, #tpu.memory_space<vmem>>, vector<128x128xf32>
      %cst_17 = arith.constant dense<0.000000e+00> : vector<2x128xf32>
      %22 = tpu.matmul %20, %21, %cst_17 {dimension_numbers = #tpu.dot_dimension_numbers<[1], [0], [0], [1], [0, 0, 1, 1], [], []>} : vector<2x128xf32>, vector<128x128xf32>, vector<2x128xf32> -> vector<2x128xf32>
      %c0_18 = arith.constant 0 : index
      %c0_19 = arith.constant 0 : index
      %23 = vector.load %arg6[%c0_18, %c0_19] : memref<1x128xf32, #tpu.memory_space<vmem>>, vector<1x128xf32>
      %24 = vector.broadcast %23 : vector<1x128xf32> to vector<2x128xf32>
      %25 = arith.addf %22, %24 : vector<2x128xf32>
      %cst_20 = arith.constant 0.000000e+00 : f32
      %26 = vector.broadcast %cst_20 : f32 to vector<2x128xf32>
      %27 = arith.cmpf ogt, %25, %26 : vector<2x128xf32>
      %cst_21 = arith.constant 0.00999999977 : f32
      %28 = vector.broadcast %cst_21 : f32 to vector<2x128xf32>
      %29 = arith.mulf %28, %25 : vector<2x128xf32>
      %30 = arith.select %27, %25, %29 : vector<2x128xi1>, vector<2x128xf32>
      %c0_22 = arith.constant 0 : index
      %c0_23 = arith.constant 0 : index
      %31 = vector.load %arg7[%c0_22, %c0_23] : memref<128x8xf32, #tpu.memory_space<vmem>>, vector<128x8xf32>
      %cst_24 = arith.constant dense<0.000000e+00> : vector<2x8xf32>
      %32 = tpu.matmul %30, %31, %cst_24 {dimension_numbers = #tpu.dot_dimension_numbers<[1], [0], [0], [1], [0, 0, 1, 1], [], []>} : vector<2x128xf32>, vector<128x8xf32>, vector<2x8xf32> -> vector<2x8xf32>
      %c0_25 = arith.constant 0 : index
      %c0_26 = arith.constant 0 : index
      %33 = vector.load %arg8[%c0_25, %c0_26] : memref<1x8xf32, #tpu.memory_space<vmem>>, vector<1x8xf32>
      %34 = vector.broadcast %33 : vector<1x8xf32> to vector<2x8xf32>
      %35 = arith.addf %32, %34 : vector<2x8xf32>
      %c0_27 = arith.constant 0 : index
      %c0_28 = arith.constant 0 : index
      %36 = vector.load %arg11[%c0_27, %c0_28] : memref<2x8xf32, #tpu.memory_space<vmem>>, vector<2x8xf32>
      tpu.vector_store %arg11[%c0_27, %c0_28], %35 {strides = array<i32>} : memref<2x8xf32, #tpu.memory_space<vmem>>, vector<2x8xf32>,
      %c0_29 = arith.constant 0 : index
      %c0_30 = arith.constant 0 : index
      %37 = vector.load %arg9[%c0_29, %c0_30] : memref<128x8xf32, #tpu.memory_space<vmem>>, vector<128x8xf32>
      %cst_31 = arith.constant dense<0.000000e+00> : vector<2x8xf32>
      %38 = tpu.matmul %30, %37, %cst_31 {dimension_numbers = #tpu.dot_dimension_numbers<[1], [0], [0], [1], [0, 0, 1, 1], [], []>} : vector<2x128xf32>, vector<128x8xf32>, vector<2x8xf32> -> vector<2x8xf32>
      %c0_32 = arith.constant 0 : index
      %c0_33 = arith.constant 0 : index
      %39 = vector.load %arg10[%c0_32, %c0_33] : memref<1x8xf32, #tpu.memory_space<vmem>>, vector<1x8xf32>
      %40 = vector.broadcast %39 : vector<1x8xf32> to vector<2x8xf32>
      %41 = arith.addf %38, %40 : vector<2x8xf32>
      %cst_34 = arith.constant 2.000000e+01 : f32
      %42 = vector.broadcast %cst_34 : f32 to vector<2x8xf32>
      %43 = arith.cmpf ogt, %41, %42 : vector<2x8xf32>
      %cst_35 = arith.constant 2.000000e+01 : f32
      %44 = vector.broadcast %cst_35 : f32 to vector<2x8xf32>
      %45 = arith.minimumf %41, %44 : vector<2x8xf32>
      %46 = math.exp %45 : vector<2x8xf32>
      %47 = math.log1p %46 : vector<2x8xf32>
      %48 = arith.select %43, %41, %47 : vector<2x8xi1>, vector<2x8xf32>
      %c0_36 = arith.constant 0 : index
      %c0_37 = arith.constant 0 : index
      %49 = vector.load %arg12[%c0_36, %c0_37] : memref<2x8xf32, #tpu.memory_space<vmem>>, vector<2x8xf32>
      tpu.vector_store %arg12[%c0_36, %c0_37], %48 {strides = array<i32>} : memref<2x8xf32, #tpu.memory_space<vmem>>, vector<2x8xf32>,
    } else {
    }
    return
  }
  func.func @transform_0(%arg0: i32, %arg1: i32) -> (i32, i32) {
    %c0_i32 = arith.constant 0 : i32
    return %arg0, %arg1 : i32, i32
  }
  func.func @transform_1(%arg0: i32, %arg1: i32) -> (i32, i32) {
    %c0_i32 = arith.constant 0 : i32
    %c0_i32_0 = arith.constant 0 : i32
    return %arg1, %c0_i32 : i32, i32
  }
  func.func @transform_2(%arg0: i32, %arg1: i32) -> (i32, i32) {
    %c0_i32 = arith.constant 0 : i32
    %c0_i32_0 = arith.constant 0 : i32
    %c0_i32_1 = arith.constant 0 : i32
    return %c0_i32, %c0_i32_0 : i32, i32
  }
  func.func @transform_3(%arg0: i32, %arg1: i32) -> (i32, i32) {
    %c0_i32 = arith.constant 0 : i32
    %c0_i32_0 = arith.constant 0 : i32
    %c0_i32_1 = arith.constant 0 : i32
    return %c0_i32, %c0_i32_0 : i32, i32
  }
  func.func @transform_4(%arg0: i32, %arg1: i32) -> (i32, i32) {
    %c0_i32 = arith.constant 0 : i32
    %c0_i32_0 = arith.constant 0 : i32
    %c0_i32_1 = arith.constant 0 : i32
    return %c0_i32, %c0_i32_0 : i32, i32
  }
  func.func @transform_5(%arg0: i32, %arg1: i32) -> (i32, i32) {
    %c0_i32 = arith.constant 0 : i32
    %c0_i32_0 = arith.constant 0 : i32
    %c0_i32_1 = arith.constant 0 : i32
    return %c0_i32, %c0_i32_0 : i32, i32
  }
  func.func @transform_6(%arg0: i32, %arg1: i32) -> (i32, i32) {
    %c0_i32 = arith.constant 0 : i32
    %c0_i32_0 = arith.constant 0 : i32
    %c0_i32_1 = arith.constant 0 : i32
    return %c0_i32, %c0_i32_0 : i32, i32
  }
  func.func @transform_7(%arg0: i32, %arg1: i32) -> (i32, i32) {
    %c0_i32 = arith.constant 0 : i32
    %c0_i32_0 = arith.constant 0 : i32
    %c0_i32_1 = arith.constant 0 : i32
    return %c0_i32, %c0_i32_0 : i32, i32
  }
  func.func @transform_8(%arg0: i32, %arg1: i32) -> (i32, i32) {
    %c0_i32 = arith.constant 0 : i32
    %c0_i32_0 = arith.constant 0 : i32
    %c0_i32_1 = arith.constant 0 : i32
    return %c0_i32, %c0_i32_0 : i32, i32
  }
  func.func @transform_9(%arg0: i32, %arg1: i32) -> (i32, i32) {
    %c0_i32 = arith.constant 0 : i32
    %c0_i32_0 = arith.constant 0 : i32
    return %arg0, %c0_i32 : i32, i32
  }
  func.func @transform_10(%arg0: i32, %arg1: i32) -> (i32, i32) {
    %c0_i32 = arith.constant 0 : i32
    %c0_i32_0 = arith.constant 0 : i32
    return %arg0, %c0_i32 : i32, i32
  }
}

</mosaic_0001>

<llo_original>
// kernel: tpu_custom_call.1
$region0: #{tpu_custom_call.1}
  #allocation0 [shape = 'u32[]', space=smem, size = 0x4, offset = 0x4, fixed_abs, tag = 'smem constant byte address 0x4 - core index']
  #allocation1 [shape = 'u32[144,128]{1,0:T(1,128)}', space=vmem, size = 0x12000, scoped, tag = 'internal scratch']
  #allocation2 [shape = 'f32[2,128]{1,0:T(2,128)}', space=vmem, size = 0x400, scoped, tag = 'scratch operand']
  %s0 = inlined_call_operand.vmem [shape: bf16[2,1024], index: 0, kind: input, shape index: {}]
  %s1 = inlined_call_operand.hbm [shape: bf16[1024,128], index: 1, kind: input, shape index: {}]
  %s2 = inlined_call_operand.vmem [shape: f32[1,128], index: 2, kind: input, shape index: {}]
  %s3 = inlined_call_operand.vmem [shape: f32[128,128], index: 3, kind: input, shape index: {}]
  %s4 = inlined_call_operand.vmem [shape: f32[1,128], index: 4, kind: input, shape index: {}]
  %s5 = inlined_call_operand.vmem [shape: f32[128,8], index: 5, kind: input, shape index: {}]
  %s6 = inlined_call_operand.vmem [shape: f32[1,8], index: 6, kind: input, shape index: {}]
  %s7 = inlined_call_operand.vmem [shape: f32[128,8], index: 7, kind: input, shape index: {}]
  %s8 = inlined_call_operand.vmem [shape: f32[1,8], index: 8, kind: input, shape index: {}]
  %s9 = inlined_call_operand.hbm [shape: f32[2,8], index: 9, kind: output, shape index: {0}]
  %s10 = inlined_call_operand.hbm [shape: f32[2,8], index: 10, kind: output, shape index: {1}]
  %11 = xla_tuple %s9, %s10
  %s12 = sld [smem:[#allocation0]]
  $region89: #{tpu_custom_call.1} parent=0
    _
  %s14 = ssub.s32 1, %s12
  %s15 = scalar_select 0, %s14, %s12
  $region1: #{tpu_custom_call.1} parent=0
    #allocation3 [shape = 'u8[262144]{0}', space=vmem, size = 0x40000, scoped, tag = 'input window, operand 1']
    #allocation4 [shape = 's32[2]{0}', space=sflag, size = 0x8, scoped, tag = 'scoped memory for tpu_custom_call.1']
    #allocation5 [shape = 's32[2]{0}', space=sflag, size = 0x8, scoped, tag = 'scoped memory for tpu_custom_call.1']
    #allocation6 [shape = 'u8[1024]{0}', space=vmem, size = 0x400, scoped, tag = 'output window, operand 0, single buffered']
    #allocation7 [shape = 'u8[1024]{0}', space=vmem, size = 0x400, scoped, tag = 'output window, operand 1, single buffered']
    #allocation8 [shape = 's32[1]{0}', space=sflag, size = 0x4, scoped, tag = 'scoped memory for tpu_custom_call.1']
    %16 = vsyncpa [#allocation4], 0
    %s17 = scalar_lea.sflag [#allocation4], 1
    %18 = vsyncpa %s17, 0
    %19 = vsyncpa [#allocation5], 0
    %20 = vsyncpa [#allocation8], 0
    loop: start=0, step=1, limit=4
    $region2: #{tpu_custom_call.1} parent=1 // loop_pre_header
      _
    $region3: #{tpu_custom_call.1} parent=1 // loop_header
      %s22 = sphi 0, %s26
      %p23 = scmp.ge.s32.totalorder %s22, 4
      %s29 = sphi 0, %s41
      %s30 = sphi 0, %s37
      %s31 = sphi 0, %s29
      %s32 = sphi 0, %s30
      %s33 = sphi 0, %s31
      %s34 = sphi 0, %s32
      %s46 = sphi 0, %s48
      %s49 = sphi 0, %s46
      %s50 = sphi 0, %s49
      %s66 = sphi 0, %s50
      %s72 = sphi 0, %s74
      %s75 = sphi 0, %s72
      %s76 = sphi 0, %s75
      %s92 = sphi 0, %s76
      %s96 = sphi 0, %s96
      %s98 = sphi 0, %s96
      %s99 = sphi 0, %s98
      %s113 = sphi 0, %s99
      %s117 = sphi 0, %s117
      %s119 = sphi 0, %s117
      %s120 = sphi 0, %s119
      %s134 = sphi 0, %s120
      %s138 = sphi 0, %s138
      %s140 = sphi 0, %s138
      %s141 = sphi 0, %s140
      %s155 = sphi 0, %s141
      %s159 = sphi 0, %s159
      %s161 = sphi 0, %s159
      %s162 = sphi 0, %s161
      %s176 = sphi 0, %s162
      %s180 = sphi 0, %s180
      %s182 = sphi 0, %s180
      %s183 = sphi 0, %s182
      %s197 = sphi 0, %s183
      %s201 = sphi 0, %s201
      %s203 = sphi 0, %s201
      %s204 = sphi 0, %s203
      %s218 = sphi 0, %s204
      %s222 = sphi 0, %s222
      %s224 = sphi 0, %s222
      %s225 = sphi 0, %s224
      %s239 = sphi 0, %s225
      %s245 = sphi 0, %s247
      %s248 = sphi 0, %s245
      %s249 = sphi 0, %s248
      %s265 = sphi 0, %s249
      %s271 = sphi 0, %s273
      %s274 = sphi 0, %s271
      %s275 = sphi 0, %s274
      %s291 = sphi 0, %s275
    $region4: #{tpu_custom_call.1} parent=1 // loop_header_branch
      %25 = sbr.rel (%p23) target = $region8
    $region5: #{tpu_custom_call.1} parent=1 // loop_body
      %s27 = ssub.s32 %s22, 1
      %s28 = ssub.s32 %s22, 2
      %s35 = sadd.s32 1, %s30
      %p36 = scmp.ge.s32.totalorder %s35, 2
      %s37 = scalar_select %p36, 0, %s35
      %s38 = sadd.s32 1, %s29
      %s39 = scalar_select %p36, %s38, %s29
      %p40 = scmp.ge.s32.totalorder %s39, 1
      %s41 = scalar_select %p40, 0, %s39
      %s42 = ssub.s32 %s29, %s41
      %s43 = ssub.s32 %s30, %s37
      %s44 = sor.u32 %s42, %s43
      %p45 = scmp.eq.s32.totalorder %s44, 0
      %s47 = sadd.s32 %s46, 1
      %s48 = scalar_select %p45, %s46, %s47
      %p51 = pneg %p45
      %p52 = scmp.eq.s32.totalorder %s22, 1
      %p53 = por %p51, %p52
      %p54 = scmp.ne.s32.totalorder %s46, %s49
      %p55 = scmp.eq.s32.totalorder %s22, 0
      %p56 = por %p54, %p55
      %p57 = scmp.ne.s32.totalorder %s46, %s49
      %p58 = scmp.eq.s32.totalorder %s27, 1
      %p59 = por %p57, %p58
      %p60 = scmp.ne.s32.totalorder %s49, %s50
      %p61 = scmp.eq.s32.totalorder %s27, 0
      %p62 = por %p60, %p61
      %p63 = scmp.ne.s32.totalorder %s49, %s50
      %p64 = scmp.eq.s32.totalorder %s28, 1
      %p65 = por %p63, %p64
      %p67 = scmp.ne.s32.totalorder %s50, %s66
      %p68 = scmp.eq.s32.totalorder %s28, 0
      %p69 = por %p67, %p68
      %s70 = ssub.s32 %s30, %s37
      %p71 = scmp.eq.s32.totalorder %s70, 0
      %s73 = sadd.s32 %s72, 1
      %s74 = scalar_select %p71, %s72, %s73
      %p77 = pneg %p71
      %p78 = scmp.eq.s32.totalorder %s22, 1
      %p79 = por %p77, %p78
      %p80 = scmp.ne.s32.totalorder %s72, %s75
      %p81 = scmp.eq.s32.totalorder %s22, 0
      %p82 = por %p80, %p81
      %p83 = scmp.ne.s32.totalorder %s72, %s75
      %p84 = scmp.eq.s32.totalorder %s27, 1
      %p85 = por %p83, %p84
      %p86 = scmp.ne.s32.totalorder %s75, %s76
      %p87 = scmp.eq.s32.totalorder %s27, 0
      %p88 = por %p86, %p87
      %p89 = scmp.ne.s32.totalorder %s75, %s76
      %p90 = scmp.eq.s32.totalorder %s28, 1
      %p91 = por %p89, %p90
      %p93 = scmp.ne.s32.totalorder %s76, %s92
      %p94 = scmp.eq.s32.totalorder %s28, 0
      %p95 = por %p93, %p94
      %s97 = sadd.s32 %s96, 1
      %p100 = scmp.eq.s32.totalorder %s22, 1
      %p101 = scmp.ne.s32.totalorder %s96, %s98
      %p102 = scmp.eq.s32.totalorder %s22, 0
      %p103 = por %p101, %p102
      %p104 = scmp.ne.s32.totalorder %s96, %s98
      %p105 = scmp.eq.s32.totalorder %s27, 1
      %p106 = por %p104, %p105
      %p107 = scmp.ne.s32.totalorder %s98, %s99
      %p108 = scmp.eq.s32.totalorder %s27, 0
      %p109 = por %p107, %p108
      %p110 = scmp.ne.s32.totalorder %s98, %s99
      %p111 = scmp.eq.s32.totalorder %s28, 1
      %p112 = por %p110, %p111
      %p114 = scmp.ne.s32.totalorder %s99, %s113
      %p115 = scmp.eq.s32.totalorder %s28, 0
      %p116 = por %p114, %p115
      %s118 = sadd.s32 %s117, 1
      %p121 = scmp.eq.s32.totalorder %s22, 1
      %p122 = scmp.ne.s32.totalorder %s117, %s119
      %p123 = scmp.eq.s32.totalorder %s22, 0
      %p124 = por %p122, %p123
      %p125 = scmp.ne.s32.totalorder %s117, %s119
      %p126 = scmp.eq.s32.totalorder %s27, 1
      %p127 = por %p125, %p126
      %p128 = scmp.ne.s32.totalorder %s119, %s120
      %p129 = scmp.eq.s32.totalorder %s27, 0
      %p130 = por %p128, %p129
      %p131 = scmp.ne.s32.totalorder %s119, %s120
      %p132 = scmp.eq.s32.totalorder %s28, 1
      %p133 = por %p131, %p132
      %p135 = scmp.ne.s32.totalorder %s120, %s134
      %p136 = scmp.eq.s32.totalorder %s28, 0
      %p137 = por %p135, %p136
      %s139 = sadd.s32 %s138, 1
      %p142 = scmp.eq.s32.totalorder %s22, 1
      %p143 = scmp.ne.s32.totalorder %s138, %s140
      %p144 = scmp.eq.s32.totalorder %s22, 0
      %p145 = por %p143, %p144
      %p146 = scmp.ne.s32.totalorder %s138, %s140
      %p147 = scmp.eq.s32.totalorder %s27, 1
      %p148 = por %p146, %p147
      %p149 = scmp.ne.s32.totalorder %s140, %s141
      %p150 = scmp.eq.s32.totalorder %s27, 0
      %p151 = por %p149, %p150
      %p152 = scmp.ne.s32.totalorder %s140, %s141
      %p153 = scmp.eq.s32.totalorder %s28, 1
      %p154 = por %p152, %p153
      %p156 = scmp.ne.s32.totalorder %s141, %s155
      %p157 = scmp.eq.s32.totalorder %s28, 0
      %p158 = por %p156, %p157
      %s160 = sadd.s32 %s159, 1
      %p163 = scmp.eq.s32.totalorder %s22, 1
      %p164 = scmp.ne.s32.totalorder %s159, %s161
      %p165 = scmp.eq.s32.totalorder %s22, 0
      %p166 = por %p164, %p165
      %p167 = scmp.ne.s32.totalorder %s159, %s161
      %p168 = scmp.eq.s32.totalorder %s27, 1
      %p169 = por %p167, %p168
      %p170 = scmp.ne.s32.totalorder %s161, %s162
      %p171 = scmp.eq.s32.totalorder %s27, 0
      %p172 = por %p170, %p171
      %p173 = scmp.ne.s32.totalorder %s161, %s162
      %p174 = scmp.eq.s32.totalorder %s28, 1
      %p175 = por %p173, %p174
      %p177 = scmp.ne.s32.totalorder %s162, %s176
      %p178 = scmp.eq.s32.totalorder %s28, 0
      %p179 = por %p177, %p178
      %s181 = sadd.s32 %s180, 1
      %p184 = scmp.eq.s32.totalorder %s22, 1
      %p185 = scmp.ne.s32.totalorder %s180, %s182
      %p186 = scmp.eq.s32.totalorder %s22, 0
      %p187 = por %p185, %p186
      %p188 = scmp.ne.s32.totalorder %s180, %s182
      %p189 = scmp.eq.s32.totalorder %s27, 1
      %p190 = por %p188, %p189
      %p191 = scmp.ne.s32.totalorder %s182, %s183
      %p192 = scmp.eq.s32.totalorder %s27, 0
      %p193 = por %p191, %p192
      %p194 = scmp.ne.s32.totalorder %s182, %s183
      %p195 = scmp.eq.s32.totalorder %s28, 1
      %p196 = por %p194, %p195
      %p198 = scmp.ne.s32.totalorder %s183, %s197
      %p199 = scmp.eq.s32.totalorder %s28, 0
      %p200 = por %p198, %p199
      %s202 = sadd.s32 %s201, 1
      %p205 = scmp.eq.s32.totalorder %s22, 1
      %p206 = scmp.ne.s32.totalorder %s201, %s203
      %p207 = scmp.eq.s32.totalorder %s22, 0
      %p208 = por %p206, %p207
      %p209 = scmp.ne.s32.totalorder %s201, %s203
      %p210 = scmp.eq.s32.totalorder %s27, 1
      %p211 = por %p209, %p210
      %p212 = scmp.ne.s32.totalorder %s203, %s204
      %p213 = scmp.eq.s32.totalorder %s27, 0
      %p214 = por %p212, %p213
      %p215 = scmp.ne.s32.totalorder %s203, %s204
      %p216 = scmp.eq.s32.totalorder %s28, 1
      %p217 = por %p215, %p216
      %p219 = scmp.ne.s32.totalorder %s204, %s218
      %p220 = scmp.eq.s32.totalorder %s28, 0
      %p221 = por %p219, %p220
      %s223 = sadd.s32 %s222, 1
      %p226 = scmp.eq.s32.totalorder %s22, 1
      %p227 = scmp.ne.s32.totalorder %s222, %s224
      %p228 = scmp.eq.s32.totalorder %s22, 0
      %p229 = por %p227, %p228
      %p230 = scmp.ne.s32.totalorder %s222, %s224
      %p231 = scmp.eq.s32.totalorder %s27, 1
      %p232 = por %p230, %p231
      %p233 = scmp.ne.s32.totalorder %s224, %s225
      %p234 = scmp.eq.s32.totalorder %s27, 0
      %p235 = por %p233, %p234
      %p236 = scmp.ne.s32.totalorder %s224, %s225
      %p237 = scmp.eq.s32.totalorder %s28, 1
      %p238 = por %p236, %p237
      %p240 = scmp.ne.s32.totalorder %s225, %s239
      %p241 = scmp.eq.s32.totalorder %s28, 0
      %p242 = por %p240, %p241
      %s243 = ssub.s32 %s29, %s41
      %p244 = scmp.eq.s32.totalorder %s243, 0
      %s246 = sadd.s32 %s245, 1
      %s247 = scalar_select %p244, %s245, %s246
      %p250 = pneg %p244
      %p251 = scmp.eq.s32.totalorder %s22, 1
      %p252 = por %p250, %p251
      %p253 = scmp.ne.s32.totalorder %s245, %s248
      %p254 = scmp.eq.s32.totalorder %s22, 0
      %p255 = por %p253, %p254
      %p256 = scmp.ne.s32.totalorder %s245, %s248
      %p257 = scmp.eq.s32.totalorder %s27, 1
      %p258 = por %p256, %p257
      %p259 = scmp.ne.s32.totalorder %s248, %s249
      %p260 = scmp.eq.s32.totalorder %s27, 0
      %p261 = por %p259, %p260
      %p262 = scmp.ne.s32.totalorder %s248, %s249
      %p263 = scmp.eq.s32.totalorder %s28, 1
      %p264 = por %p262, %p263
      %p266 = scmp.ne.s32.totalorder %s249, %s265
      %p267 = scmp.eq.s32.totalorder %s28, 0
      %p268 = por %p266, %p267
      %s269 = ssub.s32 %s29, %s41
      %p270 = scmp.eq.s32.totalorder %s269, 0
      %s272 = sadd.s32 %s271, 1
      %s273 = scalar_select %p270, %s271, %s272
      %p276 = pneg %p270
      %p277 = scmp.eq.s32.totalorder %s22, 1
      %p278 = por %p276, %p277
      %p279 = scmp.ne.s32.totalorder %s271, %s274
      %p280 = scmp.eq.s32.totalorder %s22, 0
      %p281 = por %p279, %p280
      %p282 = scmp.ne.s32.totalorder %s271, %s274
      %p283 = scmp.eq.s32.totalorder %s27, 1
      %p284 = por %p282, %p283
      %p285 = scmp.ne.s32.totalorder %s274, %s275
      %p286 = scmp.eq.s32.totalorder %s27, 0
      %p287 = por %p285, %p286
      %p288 = scmp.ne.s32.totalorder %s274, %s275
      %p289 = scmp.eq.s32.totalorder %s28, 1
      %p290 = por %p288, %p289
      %p292 = scmp.ne.s32.totalorder %s275, %s291
      %p293 = scmp.eq.s32.totalorder %s28, 0
      %p294 = por %p292, %p293
      %p295 = scmp.le.s32.totalorder 1, %s22
      %p296 = scmp.lt.s32.totalorder %s22, 3
      %p297 = pnand %p295, %p296
      %p298 = pneg %p297
      // Predicated region
      $region9: #{tpu_custom_call.1} parent=5 // pred_check
        _
      $region10: #{tpu_custom_call.1} parent=5 // pred_check_branch
        %300 = sbr.rel (%p297) target = $region12
      $region11: #{tpu_custom_call.1} parent=5 // pred_region
        %s301 = ssub.s32 %s22, 1
        // Predicated region
        $region13: #{tpu_custom_call.1} parent=11 // pred_check
          %p302 = pneg %p109
        $region14: #{tpu_custom_call.1} parent=11 // pred_check_branch
          %304 = sbr.rel (%p302) target = $region16
        $region15: #{tpu_custom_call.1} parent=11 // pred_region
          _
        $region16: #{tpu_custom_call.1} parent=11 // pred_fallthru
          _
        // Predicated region
        $region17: #{tpu_custom_call.1} parent=11 // pred_check
          %p305 = pneg %p130
        $region18: #{tpu_custom_call.1} parent=11 // pred_check_branch
          %307 = sbr.rel (%p305) target = $region20
        $region19: #{tpu_custom_call.1} parent=11 // pred_region
          _
        $region20: #{tpu_custom_call.1} parent=11 // pred_fallthru
          _
        // Predicated region
        $region21: #{tpu_custom_call.1} parent=11 // pred_check
          %p308 = pneg %p151
        $region22: #{tpu_custom_call.1} parent=11 // pred_check_branch
          %310 = sbr.rel (%p308) target = $region24
        $region23: #{tpu_custom_call.1} parent=11 // pred_region
          _
        $region24: #{tpu_custom_call.1} parent=11 // pred_fallthru
          _
        // Predicated region
        $region25: #{tpu_custom_call.1} parent=11 // pred_check
          %p311 = pneg %p172
        $region26: #{tpu_custom_call.1} parent=11 // pred_check_branch
          %313 = sbr.rel (%p311) target = $region28
        $region27: #{tpu_custom_call.1} parent=11 // pred_region
          _
        $region28: #{tpu_custom_call.1} parent=11 // pred_fallthru
          _
        // Predicated region
        $region29: #{tpu_custom_call.1} parent=11 // pred_check
          %p314 = pneg %p193
        $region30: #{tpu_custom_call.1} parent=11 // pred_check_branch
          %316 = sbr.rel (%p314) target = $region32
        $region31: #{tpu_custom_call.1} parent=11 // pred_region
          _
        $region32: #{tpu_custom_call.1} parent=11 // pred_fallthru
          _
        // Predicated region
        $region33: #{tpu_custom_call.1} parent=11 // pred_check
          %p317 = pneg %p214
        $region34: #{tpu_custom_call.1} parent=11 // pred_check_branch
          %319 = sbr.rel (%p317) target = $region36
        $region35: #{tpu_custom_call.1} parent=11 // pred_region
          _
        $region36: #{tpu_custom_call.1} parent=11 // pred_fallthru
          _
        // Predicated region
        $region37: #{tpu_custom_call.1} parent=11 // pred_check
          %p320 = pneg %p235
        $region38: #{tpu_custom_call.1} parent=11 // pred_check_branch
          %322 = sbr.rel (%p320) target = $region40
        $region39: #{tpu_custom_call.1} parent=11 // pred_region
          _
        $region40: #{tpu_custom_call.1} parent=11 // pred_fallthru
          _
      $region12: #{tpu_custom_call.1} parent=5 // pred_fallthru
        _
      %p323 = scmp.lt.s32.totalorder %s22, 2
      // Predicated region
      $region41: #{tpu_custom_call.1} parent=5 // pred_check
        %p324 = pneg %p323
      $region42: #{tpu_custom_call.1} parent=5 // pred_check_branch
        %326 = sbr.rel (%p324) target = $region44
      $region43: #{tpu_custom_call.1} parent=5 // pred_region
        // Predicated region
        $region45: #{tpu_custom_call.1} parent=43 // pred_check
          %p327 = pneg %p56
        $region46: #{tpu_custom_call.1} parent=43 // pred_check_branch
          %329 = sbr.rel (%p327) target = $region48
        $region47: #{tpu_custom_call.1} parent=43 // pred_region
          %s330 = smul.u32 4, %s30
          %p331 = scmp.lt.s32.totalorder %s29, 0
          %s332 = scalar_select %p331, %s29, 0
          %p333 = scmp.lt.s32.totalorder %s330, 7
          %s334 = scalar_select %p333, %s330, 7
          %s335 = smul.addr %s332, 8
          %s336 = sadd.s32 %s334, %s335
          %s337 = scalar_lea.vmem %s0, %s336
          %s338 = smul.u32 4, %s30
        $region48: #{tpu_custom_call.1} parent=43 // pred_fallthru
          _
        // Predicated region
        $region49: #{tpu_custom_call.1} parent=43 // pred_check
          %p339 = pneg %p82
        $region50: #{tpu_custom_call.1} parent=43 // pred_check_branch
          %341 = sbr.rel (%p339) target = $region52
        $region51: #{tpu_custom_call.1} parent=43 // pred_region
          %s342 = sand.u32 %s72, 1
          %s343 = scalar_lea.sflag [#allocation4], %s342
          %s344 = sand.u32 %s72, 1
          %s345 = smul.addr %s344, 256
          %s346 = scalar_lea.vmem [#allocation3], %s345
          %s347 = smul.u32 64, %s30
          %s349 = ssub.s32 4096, 4096
          %350 = vsyncadd %s343, %s349
          %s351 = smul.addr %s347, 64
          %s352 = scalar_lea.hbm %s1, %s351
          %s353 = sshll.u32 %s346, 4
          %s354 = int_to_ptr.vmem [resolvable:$true] %s353
          %359 = dma.hbm_to_vmem [thread:$0]  %s352, 4096, %s354, %s343, 64, 64, 4
        $region52: #{tpu_custom_call.1} parent=43 // pred_fallthru
          _
      $region44: #{tpu_custom_call.1} parent=5 // pred_fallthru
        _
      %p360 = scmp.le.s32.totalorder 1, %s22
      %p361 = scmp.lt.s32.totalorder %s22, 3
      %p362 = pnand %p360, %p361
      %p363 = pneg %p362
      // Predicated region
      $region53: #{tpu_custom_call.1} parent=5 // pred_check
        _
      $region54: #{tpu_custom_call.1} parent=5 // pred_check_branch
        %365 = sbr.rel (%p362) target = $region56
      $region55: #{tpu_custom_call.1} parent=5 // pred_region
        %s366 = ssub.s32 %s22, 1
        %s367 = sand.u32 %s75, 1
        %s368 = scalar_lea.sflag [#allocation4], %s367
        %s369 = sand.u32 %s75, 1
        %s370 = smul.addr %s369, 256
        %s371 = scalar_lea.vmem [#allocation3], %s370
        // Predicated region
        $region57: #{tpu_custom_call.1} parent=55 // pred_check
          %p372 = pneg %p88
        $region58: #{tpu_custom_call.1} parent=55 // pred_check_branch
          %374 = sbr.rel (%p372) target = $region60
        $region59: #{tpu_custom_call.1} parent=55 // pred_region
          %375 = dma.done %s368, 4096
        $region60: #{tpu_custom_call.1} parent=55 // pred_fallthru
          _
        %s376 = smul.u32 4, %s32
        %p377 = scmp.lt.s32.totalorder %s31, 0
        %s378 = scalar_select %p377, %s31, 0
        %p379 = scmp.lt.s32.totalorder %s376, 7
        %s380 = scalar_select %p379, %s376, 7
        %s381 = smul.addr %s378, 8
        %s382 = sadd.s32 %s380, %s381
        %s383 = scalar_lea.vmem %s0, %s382
        %p384 = pneg %p62
        %p385 = pneg %p59
        %s386 = sand.u32 %s75, 1
        %s387 = scalar_lea.sflag [#allocation4], %s386
        %s388 = sand.u32 %s75, 1
        %s389 = smul.addr %s388, 256
        %s390 = scalar_lea.vmem [#allocation3], %s389
        %p391 = pneg %p88
        %p392 = pneg %p85
        %p393 = pneg %p109
        %p394 = pneg %p106
        %p395 = pneg %p130
        %p396 = pneg %p127
        %p397 = pneg %p151
        %p398 = pneg %p148
        %p399 = pneg %p172
        %p400 = pneg %p169
        %p401 = pneg %p193
        %p402 = pneg %p190
        %p403 = pneg %p214
        %p404 = pneg %p211
        %p405 = pneg %p235
        %p406 = pneg %p232
        %p407 = pneg %p261
        %p408 = pneg %p258
        %p409 = pneg %p287
        %p410 = pneg %p284
        %s411 = smul.u32 4, %s32
        %p412 = scmp.lt.s32.totalorder %s31, 0
        %s413 = scalar_select %p412, %s31, 0
        %p414 = scmp.lt.s32.totalorder %s411, 7
        %s415 = scalar_select %p414, %s411, 7
        %s416 = smul.addr %s413, 8
        %s417 = sadd.s32 %s415, %s416
        %s418 = scalar_lea.vmem %s0, %s417
        %s419 = smul.u32 4, %s32
        %s420 = smul.u32 64, %s32
        %p422 = scmp.eq.s32.totalorder %s32, 0
        // Predicated region
        $region61: #{tpu_custom_call.1} parent=55 // pred_check
          %p423 = pneg %p422
        $region62: #{tpu_custom_call.1} parent=55 // pred_check_branch
          %425 = sbr.rel (%p423) target = $region64
        $region63: #{tpu_custom_call.1} parent=55 // pred_region
          %426 = vst [vmem:[#allocation2] sm:$0x3] 0.0
        $region64: #{tpu_custom_call.1} parent=55 // pred_fallthru
          _
        %v427 = vld [vmem:[#allocation2] sm:$0x3]
        %v428 = vld [vmem:[%s418] sm:$0xf]
        %v429 = vld [vmem:[%s371] sm:$0xf]
        %v430 = vld [vmem:[%s371 + $0x4] sm:$0xf]
        %v431 = vld [vmem:[%s371 + $0x8] sm:$0xf]
        %v432 = vld [vmem:[%s371 + $0xc] sm:$0xf]
        %v433 = vld [vmem:[%s371 + $0x10] sm:$0xf]
        %v434 = vld [vmem:[%s371 + $0x14] sm:$0xf]
        %v435 = vld [vmem:[%s371 + $0x18] sm:$0xf]
        %v436 = vld [vmem:[%s371 + $0x1c] sm:$0xf]
        %v437 = vld [vmem:[%s371 + $0x20] sm:$0xf]
        %v438 = vld [vmem:[%s371 + $0x24] sm:$0xf]
        %v439 = vld [vmem:[%s371 + $0x28] sm:$0xf]
        %v440 = vld [vmem:[%s371 + $0x2c] sm:$0xf]
        %v441 = vld [vmem:[%s371 + $0x30] sm:$0xf]
        %v442 = vld [vmem:[%s371 + $0x34] sm:$0xf]
        %v443 = vld [vmem:[%s371 + $0x38] sm:$0xf]
        %v444 = vld [vmem:[%s371 + $0x3c] sm:$0xf]
        %v445 = vld [vmem:[%s371 + $0x40] sm:$0xf]
        %v446 = vld [vmem:[%s371 + $0x44] sm:$0xf]
        %v447 = vld [vmem:[%s371 + $0x48] sm:$0xf]
        %v448 = vld [vmem:[%s371 + $0x4c] sm:$0xf]
        %v449 = vld [vmem:[%s371 + $0x50] sm:$0xf]
        %v450 = vld [vmem:[%s371 + $0x54] sm:$0xf]
        %v451 = vld [vmem:[%s371 + $0x58] sm:$0xf]
        %v452 = vld [vmem:[%s371 + $0x5c] sm:$0xf]
        %v453 = vld [vmem:[%s371 + $0x60] sm:$0xf]
        %v454 = vld [vmem:[%s371 + $0x64] sm:$0xf]
        %v455 = vld [vmem:[%s371 + $0x68] sm:$0xf]
        %v456 = vld [vmem:[%s371 + $0x6c] sm:$0xf]
        %v457 = vld [vmem:[%s371 + $0x70] sm:$0xf]
        %v458 = vld [vmem:[%s371 + $0x74] sm:$0xf]
        %v459 = vld [vmem:[%s371 + $0x78] sm:$0xf]
        %v460 = vld [vmem:[%s371 + $0x7c] sm:$0xf]
        %v461 = vld [vmem:[%s371 + $0x80] sm:$0xf]
        %v462 = vld [vmem:[%s371 + $0x84] sm:$0xf]
        %v463 = vld [vmem:[%s371 + $0x88] sm:$0xf]
        %v464 = vld [vmem:[%s371 + $0x8c] sm:$0xf]
        %v465 = vld [vmem:[%s371 + $0x90] sm:$0xf]
        %v466 = vld [vmem:[%s371 + $0x94] sm:$0xf]
        %v467 = vld [vmem:[%s371 + $0x98] sm:$0xf]
        %v468 = vld [vmem:[%s371 + $0x9c] sm:$0xf]
        %v469 = vld [vmem:[%s371 + $0xa0] sm:$0xf]
        %v470 = vld [vmem:[%s371 + $0xa4] sm:$0xf]
        %v471 = vld [vmem:[%s371 + $0xa8] sm:$0xf]
        %v472 = vld [vmem:[%s371 + $0xac] sm:$0xf]
        %v473 = vld [vmem:[%s371 + $0xb0] sm:$0xf]
        %v474 = vld [vmem:[%s371 + $0xb4] sm:$0xf]
        %v475 = vld [vmem:[%s371 + $0xb8] sm:$0xf]
        %v476 = vld [vmem:[%s371 + $0xbc] sm:$0xf]
        %v477 = vld [vmem:[%s371 + $0xc0] sm:$0xf]
        %v478 = vld [vmem:[%s371 + $0xc4] sm:$0xf]
        %v479 = vld [vmem:[%s371 + $0xc8] sm:$0xf]
        %v480 = vld [vmem:[%s371 + $0xcc] sm:$0xf]
        %v481 = vld [vmem:[%s371 + $0xd0] sm:$0xf]
        %v482 = vld [vmem:[%s371 + $0xd4] sm:$0xf]
        %v483 = vld [vmem:[%s371 + $0xd8] sm:$0xf]
        %v484 = vld [vmem:[%s371 + $0xdc] sm:$0xf]
        %v485 = vld [vmem:[%s371 + $0xe0] sm:$0xf]
        %v486 = vld [vmem:[%s371 + $0xe4] sm:$0xf]
        %v487 = vld [vmem:[%s371 + $0xe8] sm:$0xf]
        %v488 = vld [vmem:[%s371 + $0xec] sm:$0xf]
        %v489 = vld [vmem:[%s371 + $0xf0] sm:$0xf]
        %v490 = vld [vmem:[%s371 + $0xf4] sm:$0xf]
        %v491 = vld [vmem:[%s371 + $0xf8] sm:$0xf]
        %v492 = vld [vmem:[%s371 + $0xfc] sm:$0xf]
        %v495 = vunpack.c.l.s4 1966171168
        %v496 = vunpack.c.0.s8 %v495
        %v497 = vlaneseq
        %v498 = vshrl.u32 %v497, 7
        %v499 = vsub.s32 %v496, %v498
        %v500 = vrot.slane %v428, %v499
        %v501 = vcombine.high %v500, %v500
        %v503 = vunpack.c.l.s4 1966171168
        %v504 = vunpack.c.0.s8 %v503
        %v505 = vlaneseq
        %v506 = vshrl.u32 %v505, 7
        %v507 = vsub.s32 %v504, %v506
        %v508 = vrot.slane %v500, %v507
        %v510 = vunpack.c.l.s4 1966171168
        %v511 = vunpack.c.0.s8 %v510
        %v512 = vlaneseq
        %v513 = vshrl.u32 %v512, 7
        %v514 = vsub.s32 %v511, %v513
        %v515 = vrot.slane %v501, %v514
        %v516 = vcombine.high %v508, %v508
        %v517 = vcombine.high %v515, %v515
        %v586 = vunpack.c.l.b16 %v429
        %v587 = vunpack.c.l.b16 %v430
        %v588 = vunpack.c.l.b16 %v431
        %v589 = vunpack.c.l.b16 %v432
        %v590 = vunpack.c.l.b16 %v433
        %v591 = vunpack.c.l.b16 %v434
        %v592 = vunpack.c.l.b16 %v435
        %v593 = vunpack.c.l.b16 %v436
        %v594 = vunpack.c.l.b16 %v437
        %v595 = vunpack.c.l.b16 %v438
        %v596 = vunpack.c.l.b16 %v439
        %v597 = vunpack.c.l.b16 %v440
        %v598 = vunpack.c.l.b16 %v441
        %v599 = vunpack.c.l.b16 %v442
        %v600 = vunpack.c.l.b16 %v443
        %v601 = vunpack.c.l.b16 %v444
        %v602 = vunpack.c.l.b16 %v445
        %v603 = vunpack.c.l.b16 %v446
        %v604 = vunpack.c.l.b16 %v447
        %v605 = vunpack.c.l.b16 %v448
        %v606 = vunpack.c.l.b16 %v449
        %v607 = vunpack.c.l.b16 %v450
        %v608 = vunpack.c.l.b16 %v451
        %v609 = vunpack.c.l.b16 %v452
        %v610 = vunpack.c.l.b16 %v453
        %v611 = vunpack.c.l.b16 %v454
        %v612 = vunpack.c.l.b16 %v455
        %v613 = vunpack.c.l.b16 %v456
        %v614 = vunpack.c.l.b16 %v457
        %v615 = vunpack.c.l.b16 %v458
        %v616 = vunpack.c.l.b16 %v459
        %v617 = vunpack.c.l.b16 %v460
        %v618 = vunpack.c.l.b16 %v461
        %v619 = vunpack.c.l.b16 %v462
        %v620 = vunpack.c.l.b16 %v463
        %v621 = vunpack.c.l.b16 %v464
        %v622 = vunpack.c.l.b16 %v465
        %v623 = vunpack.c.l.b16 %v466
        %v624 = vunpack.c.l.b16 %v467
        %v625 = vunpack.c.l.b16 %v468
        %v626 = vunpack.c.l.b16 %v469
        %v627 = vunpack.c.l.b16 %v470
        %v628 = vunpack.c.l.b16 %v471
        %v629 = vunpack.c.l.b16 %v472
        %v630 = vunpack.c.l.b16 %v473
        %v631 = vunpack.c.l.b16 %v474
        %v632 = vunpack.c.l.b16 %v475
        %v633 = vunpack.c.l.b16 %v476
        %v634 = vunpack.c.l.b16 %v477
        %v635 = vunpack.c.l.b16 %v478
        %v636 = vunpack.c.l.b16 %v479
        %v637 = vunpack.c.l.b16 %v480
        %v638 = vunpack.c.l.b16 %v481
        %v639 = vunpack.c.l.b16 %v482
        %v640 = vunpack.c.l.b16 %v483
        %v641 = vunpack.c.l.b16 %v484
        %v642 = vunpack.c.l.b16 %v485
        %v643 = vunpack.c.l.b16 %v486
        %v644 = vunpack.c.l.b16 %v487
        %v645 = vunpack.c.l.b16 %v488
        %v646 = vunpack.c.l.b16 %v489
        %v647 = vunpack.c.l.b16 %v490
        %v648 = vunpack.c.l.b16 %v491
        %v649 = vunpack.c.l.b16 %v492
        %v650 = vpack.c.b16 %v587, %v586
        %v651 = vpack.c.b16 %v589, %v588
        %v652 = vpack.c.b16 %v591, %v590
        %v653 = vpack.c.b16 %v593, %v592
        %v654 = vpack.c.b16 %v595, %v594
        %v655 = vpack.c.b16 %v597, %v596
        %v656 = vpack.c.b16 %v599, %v598
        %v657 = vpack.c.b16 %v601, %v600
        %v658 = vpack.c.b16 %v603, %v602
        %v659 = vpack.c.b16 %v605, %v604
        %v660 = vpack.c.b16 %v607, %v606
        %v661 = vpack.c.b16 %v609, %v608
        %v662 = vpack.c.b16 %v611, %v610
        %v663 = vpack.c.b16 %v613, %v612
        %v664 = vpack.c.b16 %v615, %v614
        %v665 = vpack.c.b16 %v617, %v616
        %v666 = vpack.c.b16 %v619, %v618
        %v667 = vpack.c.b16 %v621, %v620
        %v668 = vpack.c.b16 %v623, %v622
        %v669 = vpack.c.b16 %v625, %v624
        %v670 = vpack.c.b16 %v627, %v626
        %v671 = vpack.c.b16 %v629, %v628
        %v672 = vpack.c.b16 %v631, %v630
        %v673 = vpack.c.b16 %v633, %v632
        %v674 = vpack.c.b16 %v635, %v634
        %v675 = vpack.c.b16 %v637, %v636
        %v676 = vpack.c.b16 %v639, %v638
        %v677 = vpack.c.b16 %v641, %v640
        %v678 = vpack.c.b16 %v643, %v642
        %v679 = vpack.c.b16 %v645, %v644
        %v680 = vpack.c.b16 %v647, %v646
        %v681 = vpack.c.b16 %v649, %v648
        %714 = vmatprep.subr.bf16.mxu0 0
        %715 = vmatpush1.bf16.msra.mxu0 %v650
        %716 = vmatprep.subr.bf16.mxu0 0
        %717 = vmatpush1.bf16.msra.mxu0 %v651
        %718 = vmatprep.subr.bf16.mxu0 0
        %719 = vmatpush1.bf16.msra.mxu0 %v652
        %720 = vmatprep.subr.bf16.mxu0 0
        %721 = vmatpush1.bf16.msra.mxu0 %v653
        %722 = vmatprep.subr.bf16.mxu0 0
        %723 = vmatpush1.bf16.msra.mxu0 %v654
        %724 = vmatprep.subr.bf16.mxu0 0
        %725 = vmatpush1.bf16.msra.mxu0 %v655
        %726 = vmatprep.subr.bf16.mxu0 0
        %727 = vmatpush1.bf16.msra.mxu0 %v656
        %728 = vmatprep.subr.bf16.mxu0 0
        %729 = vmatpush1.bf16.msra.mxu0 %v657
        %730 = vmatprep.subr.bf16.mxu0 0
        %731 = vmatpush1.bf16.msra.mxu0 %v658
        %732 = vmatprep.subr.bf16.mxu0 0
        %733 = vmatpush1.bf16.msra.mxu0 %v659
        %734 = vmatprep.subr.bf16.mxu0 0
        %735 = vmatpush1.bf16.msra.mxu0 %v660
        %736 = vmatprep.subr.bf16.mxu0 0
        %737 = vmatpush1.bf16.msra.mxu0 %v661
        %738 = vmatprep.subr.bf16.mxu0 0
        %739 = vmatpush1.bf16.msra.mxu0 %v662
        %740 = vmatprep.subr.bf16.mxu0 0
        %741 = vmatpush1.bf16.msra.mxu0 %v663
        %742 = vmatprep.subr.bf16.mxu0 0
        %743 = vmatpush1.bf16.msra.mxu0 %v664
        %744 = vmatprep.subr.bf16.mxu0 0
        %745 = vmatpush1.bf16.msra.mxu0 %v665
        %746 = vmatprep.mubr.bf16.mxu0 %v515
        %747 = vmatmul.mubr.bf16.gmra.mrb[0].mxu0 %v508
        %v748 = vpop.f32.mrb[0].mxu0
        %v749 = vadd.f32 0.0, %v748
        %v750 = vpop.f32.mrb[0].mxu0
        %v751 = vpop.f32.mrb[0].mxu0
        %v752 = vpop.f32.mrb[0].mxu0
        %753 = vdwg.mxu0
        %754 = vmatprep.subr.bf16.mxu0 0
        %755 = vmatpush1.bf16.msra.mxu0 %v666
        %756 = vmatprep.subr.bf16.mxu0 0
        %757 = vmatpush1.bf16.msra.mxu0 %v667
        %758 = vmatprep.subr.bf16.mxu0 0
        %759 = vmatpush1.bf16.msra.mxu0 %v668
        %760 = vmatprep.subr.bf16.mxu0 0
        %761 = vmatpush1.bf16.msra.mxu0 %v669
        %762 = vmatprep.subr.bf16.mxu0 0
        %763 = vmatpush1.bf16.msra.mxu0 %v670
        %764 = vmatprep.subr.bf16.mxu0 0
        %765 = vmatpush1.bf16.msra.mxu0 %v671
        %766 = vmatprep.subr.bf16.mxu0 0
        %767 = vmatpush1.bf16.msra.mxu0 %v672
        %768 = vmatprep.subr.bf16.mxu0 0
        %769 = vmatpush1.bf16.msra.mxu0 %v673
        %770 = vmatprep.subr.bf16.mxu0 0
        %771 = vmatpush1.bf16.msra.mxu0 %v674
        %772 = vmatprep.subr.bf16.mxu0 0
        %773 = vmatpush1.bf16.msra.mxu0 %v675
        %774 = vmatprep.subr.bf16.mxu0 0
        %775 = vmatpush1.bf16.msra.mxu0 %v676
        %776 = vmatprep.subr.bf16.mxu0 0
        %777 = vmatpush1.bf16.msra.mxu0 %v677
        %778 = vmatprep.subr.bf16.mxu0 0
        %779 = vmatpush1.bf16.msra.mxu0 %v678
        %780 = vmatprep.subr.bf16.mxu0 0
        %781 = vmatpush1.bf16.msra.mxu0 %v679
        %782 = vmatprep.subr.bf16.mxu0 0
        %783 = vmatpush1.bf16.msra.mxu0 %v680
        %784 = vmatprep.subr.bf16.mxu0 0
        %785 = vmatpush1.bf16.msra.mxu0 %v681
        %786 = vmatprep.mubr.bf16.mxu0 %v517
        %787 = vmatmul.mubr.bf16.gmra.mrb[0].mxu0 %v516
        %v788 = vpop.f32.mrb[0].mxu0
        %v789 = vadd.f32 %v749, %v788
        %v790 = vpop.f32.mrb[0].mxu0
        %v791 = vpop.f32.mrb[0].mxu0
        %v792 = vpop.f32.mrb[0].mxu0
        %793 = vdwg.mxu0
        %v794 = vadd.f32 %v427, %v789
        %795 = vst [vmem:[#allocation2] sm:$0x3] %v794
        %p796 = scmp.eq.s32.totalorder %s32, 1
        // Predicated region
        $region65: #{tpu_custom_call.1} parent=55 // pred_check
          %p797 = pneg %p796
        $region66: #{tpu_custom_call.1} parent=55 // pred_check_branch
          %799 = sbr.rel (%p797) target = $region68
        $region67: #{tpu_custom_call.1} parent=55 // pred_region
          %v800 = vld [vmem:[#allocation2] sm:$0x3]
          %v801 = vld [vmem:[%s2] sm:$0x1]
          %v803 = vlaneseq
          %v804 = vshrl.u32 %v803, 7
          %v805 = vsub.s32 0, %v804
          %v806 = vrot.slane %v801, %v805
          %v808 = vadd.f32 %v800, %v806
          %vm809 = vcmp.gt.f32.partialorder %v808, 0.0
          %v810 = vmul.f32 %v808, 0.01
          %v811 = vsel %vm809, %v808, %v810
          %v812 = vld [vmem:[%s3] sm:$0xff]
          %v813 = vld [vmem:[%s3 + $0x8] sm:$0xff]
          %v814 = vld [vmem:[%s3 + $0x10] sm:$0xff]
          %v815 = vld [vmem:[%s3 + $0x18] sm:$0xff]
          %v816 = vld [vmem:[%s3 + $0x20] sm:$0xff]
          %v817 = vld [vmem:[%s3 + $0x28] sm:$0xff]
          %v818 = vld [vmem:[%s3 + $0x30] sm:$0xff]
          %v819 = vld [vmem:[%s3 + $0x38] sm:$0xff]
          %v820 = vld [vmem:[%s3 + $0x40] sm:$0xff]
          %v821 = vld [vmem:[%s3 + $0x48] sm:$0xff]
          %v822 = vld [vmem:[%s3 + $0x50] sm:$0xff]
          %v823 = vld [vmem:[%s3 + $0x58] sm:$0xff]
          %v824 = vld [vmem:[%s3 + $0x60] sm:$0xff]
          %v825 = vld [vmem:[%s3 + $0x68] sm:$0xff]
          %v826 = vld [vmem:[%s3 + $0x70] sm:$0xff]
          %v827 = vld [vmem:[%s3 + $0x78] sm:$0xff]
          %v828 = vld [vmem:[%s4] sm:$0x1]
          %v830 = vlaneseq
          %v831 = vshrl.u32 %v830, 7
          %v832 = vsub.s32 0, %v831
          %v833 = vrot.slane %v828, %v832
          %835 = vmatprep.subr.mxu0 0.0
          %836 = vmatpush1.msra.mxu0 %v812
          %837 = vmatprep.subr.mxu0 0.0
          %838 = vmatpush1.msra.mxu0 %v813
          %839 = vmatprep.subr.mxu0 0.0
          %840 = vmatpush1.msra.mxu0 %v814
          %841 = vmatprep.subr.mxu0 0.0
          %842 = vmatpush1.msra.mxu0 %v815
          %843 = vmatprep.subr.mxu0 0.0
          %844 = vmatpush1.msra.mxu0 %v816
          %845 = vmatprep.subr.mxu0 0.0
          %846 = vmatpush1.msra.mxu0 %v817
          %847 = vmatprep.subr.mxu0 0.0
          %848 = vmatpush1.msra.mxu0 %v818
          %849 = vmatprep.subr.mxu0 0.0
          %850 = vmatpush1.msra.mxu0 %v819
          %851 = vmatprep.subr.mxu0 0.0
          %852 = vmatpush1.msra.mxu0 %v820
          %853 = vmatprep.subr.mxu0 0.0
          %854 = vmatpush1.msra.mxu0 %v821
          %855 = vmatprep.subr.mxu0 0.0
          %856 = vmatpush1.msra.mxu0 %v822
          %857 = vmatprep.subr.mxu0 0.0
          %858 = vmatpush1.msra.mxu0 %v823
          %859 = vmatprep.subr.mxu0 0.0
          %860 = vmatpush1.msra.mxu0 %v824
          %861 = vmatprep.subr.mxu0 0.0
          %862 = vmatpush1.msra.mxu0 %v825
          %863 = vmatprep.subr.mxu0 0.0
          %864 = vmatpush1.msra.mxu0 %v826
          %865 = vmatprep.subr.mxu0 0.0
          %866 = vmatpush1.msra.mxu0 %v827
          %867 = vmatprep.subr.mxu0 0.0
          %868 = vmatpush1.msra.mxu0 0.0
          %869 = vmatprep.subr.mxu0 0.0
          %870 = vmatpush1.msra.mxu0 0.0
          %871 = vmatprep.subr.mxu0 0.0
          %872 = vmatpush1.msra.mxu0 0.0
          %873 = vmatprep.subr.mxu0 0.0
          %874 = vmatpush1.msra.mxu0 0.0
          %875 = vmatprep.subr.mxu0 0.0
          %876 = vmatpush1.msra.mxu0 0.0
          %877 = vmatprep.subr.mxu0 0.0
          %878 = vmatpush1.msra.mxu0 0.0
          %879 = vmatprep.subr.mxu0 0.0
          %880 = vmatpush1.msra.mxu0 0.0
          %881 = vmatprep.subr.mxu0 0.0
          %882 = vmatpush1.msra.mxu0 0.0
          %883 = vmatprep.subr.mxu0 0.0
          %884 = vmatpush1.msra.mxu0 0.0
          %885 = vmatprep.subr.mxu0 0.0
          %886 = vmatpush1.msra.mxu0 0.0
          %887 = vmatprep.subr.mxu0 0.0
          %888 = vmatpush1.msra.mxu0 0.0
          %889 = vmatprep.subr.mxu0 0.0
          %890 = vmatpush1.msra.mxu0 0.0
          %891 = vmatprep.subr.mxu0 0.0
          %892 = vmatpush1.msra.mxu0 0.0
          %893 = vmatprep.subr.mxu0 0.0
          %894 = vmatpush1.msra.mxu0 0.0
          %895 = vmatprep.subr.mxu0 0.0
          %896 = vmatpush1.msra.mxu0 0.0
          %897 = vmatprep.subr.mxu0 0.0
          %898 = vmatpush1.msra.mxu0 0.0
          %899 = vmatprep.mubr.f32.mxu0 0.0
          %900 = vmatmul.mubr.f32.gmra.mrb[0].mxu0 %v811
          %v901 = vpop.f32.mrb[0].mxu0
          %v902 = vadd.f32 %v833, %v901
          %v903 = vpop.f32.mrb[0].mxu0
          %904 = vdwg.mxu0
          %vm905 = vcmp.gt.f32.partialorder %v902, 0.0
          %v906 = vmul.f32 %v902, 0.01
          %v907 = vsel %vm905, %v902, %v906
          %v908 = vld [vmem:[%s5] sm:$0xff]
          %v909 = vld [vmem:[%s5 + $0x8] sm:$0xff]
          %v910 = vld [vmem:[%s5 + $0x10] sm:$0xff]
          %v911 = vld [vmem:[%s5 + $0x18] sm:$0xff]
          %v912 = vld [vmem:[%s5 + $0x20] sm:$0xff]
          %v913 = vld [vmem:[%s5 + $0x28] sm:$0xff]
          %v914 = vld [vmem:[%s5 + $0x30] sm:$0xff]
          %v915 = vld [vmem:[%s5 + $0x38] sm:$0xff]
          %v916 = vld [vmem:[%s5 + $0x40] sm:$0xff]
          %v917 = vld [vmem:[%s5 + $0x48] sm:$0xff]
          %v918 = vld [vmem:[%s5 + $0x50] sm:$0xff]
          %v919 = vld [vmem:[%s5 + $0x58] sm:$0xff]
          %v920 = vld [vmem:[%s5 + $0x60] sm:$0xff]
          %v921 = vld [vmem:[%s5 + $0x68] sm:$0xff]
          %v922 = vld [vmem:[%s5 + $0x70] sm:$0xff]
          %v923 = vld [vmem:[%s5 + $0x78] sm:$0xff]
          %v924 = vld [vmem:[%s6] sm:$0x1]
          %v926 = vlaneseq
          %v927 = vshrl.u32 %v926, 7
          %v928 = vsub.s32 0, %v927
          %v929 = vrot.slane %v924, %v928
          %931 = vmatprep.subr.mxu0 0.0
          %932 = vmatpush1.msra.mxu0 %v908
          %933 = vmatprep.subr.mxu0 0.0
          %934 = vmatpush1.msra.mxu0 %v909
          %935 = vmatprep.subr.mxu0 0.0
          %936 = vmatpush1.msra.mxu0 %v910
          %937 = vmatprep.subr.mxu0 0.0
          %938 = vmatpush1.msra.mxu0 %v911
          %939 = vmatprep.subr.mxu0 0.0
          %940 = vmatpush1.msra.mxu0 %v912
          %941 = vmatprep.subr.mxu0 0.0
          %942 = vmatpush1.msra.mxu0 %v913
          %943 = vmatprep.subr.mxu0 0.0
          %944 = vmatpush1.msra.mxu0 %v914
          %945 = vmatprep.subr.mxu0 0.0
          %946 = vmatpush1.msra.mxu0 %v915
          %947 = vmatprep.subr.mxu0 0.0
          %948 = vmatpush1.msra.mxu0 %v916
          %949 = vmatprep.subr.mxu0 0.0
          %950 = vmatpush1.msra.mxu0 %v917
          %951 = vmatprep.subr.mxu0 0.0
          %952 = vmatpush1.msra.mxu0 %v918
          %953 = vmatprep.subr.mxu0 0.0
          %954 = vmatpush1.msra.mxu0 %v919
          %955 = vmatprep.subr.mxu0 0.0
          %956 = vmatpush1.msra.mxu0 %v920
          %957 = vmatprep.subr.mxu0 0.0
          %958 = vmatpush1.msra.mxu0 %v921
          %959 = vmatprep.subr.mxu0 0.0
          %960 = vmatpush1.msra.mxu0 %v922
          %961 = vmatprep.subr.mxu0 0.0
          %962 = vmatpush1.msra.mxu0 %v923
          %963 = vmatprep.subr.mxu0 0.0
          %964 = vmatpush1.msra.mxu0 0.0
          %965 = vmatprep.subr.mxu0 0.0
          %966 = vmatpush1.msra.mxu0 0.0
          %967 = vmatprep.subr.mxu0 0.0
          %968 = vmatpush1.msra.mxu0 0.0
          %969 = vmatprep.subr.mxu0 0.0
          %970 = vmatpush1.msra.mxu0 0.0
          %971 = vmatprep.subr.mxu0 0.0
          %972 = vmatpush1.msra.mxu0 0.0
          %973 = vmatprep.subr.mxu0 0.0
          %974 = vmatpush1.msra.mxu0 0.0
          %975 = vmatprep.subr.mxu0 0.0
          %976 = vmatpush1.msra.mxu0 0.0
          %977 = vmatprep.subr.mxu0 0.0
          %978 = vmatpush1.msra.mxu0 0.0
          %979 = vmatprep.subr.mxu0 0.0
          %980 = vmatpush1.msra.mxu0 0.0
          %981 = vmatprep.subr.mxu0 0.0
          %982 = vmatpush1.msra.mxu0 0.0
          %983 = vmatprep.subr.mxu0 0.0
          %984 = vmatpush1.msra.mxu0 0.0
          %985 = vmatprep.subr.mxu0 0.0
          %986 = vmatpush1.msra.mxu0 0.0
          %987 = vmatprep.subr.mxu0 0.0
          %988 = vmatpush1.msra.mxu0 0.0
          %989 = vmatprep.subr.mxu0 0.0
          %990 = vmatpush1.msra.mxu0 0.0
          %991 = vmatprep.subr.mxu0 0.0
          %992 = vmatpush1.msra.mxu0 0.0
          %993 = vmatprep.subr.mxu0 0.0
          %994 = vmatpush1.msra.mxu0 0.0
          %995 = vmatprep.mubr.f32.mxu0 0.0
          %996 = vmatmul.mubr.f32.gmra.mrb[0].mxu0 %v907
          %v997 = vpop.f32.mrb[0].mxu0
          %v998 = vadd.f32 %v929, %v997
          %v999 = vpop.f32.mrb[0].mxu0
          %1000 = vdwg.mxu0
          %vm1001 = vcmask 58368
          %1002 = vst.msk [vmem:[#allocation6] sm:$0x3] %vm1001, %v998
          %v1003 = vld [vmem:[%s7] sm:$0xff]
          %v1004 = vld [vmem:[%s7 + $0x8] sm:$0xff]
          %v1005 = vld [vmem:[%s7 + $0x10] sm:$0xff]
          %v1006 = vld [vmem:[%s7 + $0x18] sm:$0xff]
          %v1007 = vld [vmem:[%s7 + $0x20] sm:$0xff]
          %v1008 = vld [vmem:[%s7 + $0x28] sm:$0xff]
          %v1009 = vld [vmem:[%s7 + $0x30] sm:$0xff]
          %v1010 = vld [vmem:[%s7 + $0x38] sm:$0xff]
          %v1011 = vld [vmem:[%s7 + $0x40] sm:$0xff]
          %v1012 = vld [vmem:[%s7 + $0x48] sm:$0xff]
          %v1013 = vld [vmem:[%s7 + $0x50] sm:$0xff]
          %v1014 = vld [vmem:[%s7 + $0x58] sm:$0xff]
          %v1015 = vld [vmem:[%s7 + $0x60] sm:$0xff]
          %v1016 = vld [vmem:[%s7 + $0x68] sm:$0xff]
          %v1017 = vld [vmem:[%s7 + $0x70] sm:$0xff]
          %v1018 = vld [vmem:[%s7 + $0x78] sm:$0xff]
          %v1019 = vld [vmem:[%s8] sm:$0x1]
          %v1021 = vlaneseq
          %v1022 = vshrl.u32 %v1021, 7
          %v1023 = vsub.s32 0, %v1022
          %v1024 = vrot.slane %v1019, %v1023
          %1026 = vmatprep.subr.mxu0 0.0
          %1027 = vmatpush1.msra.mxu0 %v1003
          %1028 = vmatprep.subr.mxu0 0.0
          %1029 = vmatpush1.msra.mxu0 %v1004
          %1030 = vmatprep.subr.mxu0 0.0
          %1031 = vmatpush1.msra.mxu0 %v1005
          %1032 = vmatprep.subr.mxu0 0.0
          %1033 = vmatpush1.msra.mxu0 %v1006
          %1034 = vmatprep.subr.mxu0 0.0
          %1035 = vmatpush1.msra.mxu0 %v1007
          %1036 = vmatprep.subr.mxu0 0.0
          %1037 = vmatpush1.msra.mxu0 %v1008
          %1038 = vmatprep.subr.mxu0 0.0
          %1039 = vmatpush1.msra.mxu0 %v1009
          %1040 = vmatprep.subr.mxu0 0.0
          %1041 = vmatpush1.msra.mxu0 %v1010
          %1042 = vmatprep.subr.mxu0 0.0
          %1043 = vmatpush1.msra.mxu0 %v1011
          %1044 = vmatprep.subr.mxu0 0.0
          %1045 = vmatpush1.msra.mxu0 %v1012
          %1046 = vmatprep.subr.mxu0 0.0
          %1047 = vmatpush1.msra.mxu0 %v1013
          %1048 = vmatprep.subr.mxu0 0.0
          %1049 = vmatpush1.msra.mxu0 %v1014
          %1050 = vmatprep.subr.mxu0 0.0
          %1051 = vmatpush1.msra.mxu0 %v1015
          %1052 = vmatprep.subr.mxu0 0.0
          %1053 = vmatpush1.msra.mxu0 %v1016
          %1054 = vmatprep.subr.mxu0 0.0
          %1055 = vmatpush1.msra.mxu0 %v1017
          %1056 = vmatprep.subr.mxu0 0.0
          %1057 = vmatpush1.msra.mxu0 %v1018
          %1058 = vmatprep.subr.mxu0 0.0
          %1059 = vmatpush1.msra.mxu0 0.0
          %1060 = vmatprep.subr.mxu0 0.0
          %1061 = vmatpush1.msra.mxu0 0.0
          %1062 = vmatprep.subr.mxu0 0.0
          %1063 = vmatpush1.msra.mxu0 0.0
          %1064 = vmatprep.subr.mxu0 0.0
          %1065 = vmatpush1.msra.mxu0 0.0
          %1066 = vmatprep.subr.mxu0 0.0
          %1067 = vmatpush1.msra.mxu0 0.0
          %1068 = vmatprep.subr.mxu0 0.0
          %1069 = vmatpush1.msra.mxu0 0.0
          %1070 = vmatprep.subr.mxu0 0.0
          %1071 = vmatpush1.msra.mxu0 0.0
          %1072 = vmatprep.subr.mxu0 0.0
          %1073 = vmatpush1.msra.mxu0 0.0
          %1074 = vmatprep.subr.mxu0 0.0
          %1075 = vmatpush1.msra.mxu0 0.0
          %1076 = vmatprep.subr.mxu0 0.0
          %1077 = vmatpush1.msra.mxu0 0.0
          %1078 = vmatprep.subr.mxu0 0.0
          %1079 = vmatpush1.msra.mxu0 0.0
          %1080 = vmatprep.subr.mxu0 0.0
          %1081 = vmatpush1.msra.mxu0 0.0
          %1082 = vmatprep.subr.mxu0 0.0
          %1083 = vmatpush1.msra.mxu0 0.0
          %1084 = vmatprep.subr.mxu0 0.0
          %1085 = vmatpush1.msra.mxu0 0.0
          %1086 = vmatprep.subr.mxu0 0.0
          %1087 = vmatpush1.msra.mxu0 0.0
          %1088 = vmatprep.subr.mxu0 0.0
          %1089 = vmatpush1.msra.mxu0 0.0
          %1090 = vmatprep.mubr.f32.mxu0 0.0
          %1091 = vmatmul.mubr.f32.gmra.mrb[0].mxu0 %v907
          %v1092 = vpop.f32.mrb[0].mxu0
          %v1093 = vadd.f32 %v1024, %v1092
          %v1094 = vpop.f32.mrb[0].mxu0
          %1095 = vdwg.mxu0
          %vm1096 = vcmp.gt.f32.partialorder %v1093, 20.0
          %v1097 = vmin.f32 %v1093, 20.0
          %v1098 = vmul.f32 %v1097, 1.442695
          %v1099 = vpow.pop %v1098
          %v1100 = vadd.f32 %v1099, 1.0
          %v1101 = vlog2.pop %v1100
          %v1102 = vmul.f32 %v1101, 0.6931472
          %v1103 = vmul.f32 -0.5, %v1099
          %v1104 = vadd.f32 %v1103, 1.0
          %v1105 = vmul.f32 %v1104, %v1099
          %v1106 = vand.u32 2147483647, %v1099
          %vm1107 = vcmp.lt.f32.partialorder %v1106, 0.0004427343
          %v1108 = vsel %vm1107, %v1105, %v1102
          %v1109 = vsel %vm1096, %v1093, %v1108
          %1110 = vst.msk [vmem:[#allocation7] sm:$0x3] %vm1001, %v1109
        $region68: #{tpu_custom_call.1} parent=55 // pred_fallthru
          _
        // Predicated region
        $region69: #{tpu_custom_call.1} parent=55 // pred_check
          %p1111 = pneg %p258
        $region70: #{tpu_custom_call.1} parent=55 // pred_check_branch
          %1113 = sbr.rel (%p1111) target = $region72
        $region71: #{tpu_custom_call.1} parent=55 // pred_region
          %s1115 = ssub.s32 32, 32
          %1116 = vsyncadd [#allocation5], %s1115
          %s1117 = smul.addr %s31, 32
          %s1118 = scalar_lea.hbm %s9, %s1117
          %s1120 = sshll.u32 [#allocation6], 4
          %s1121 = int_to_ptr.vmem [resolvable:$true] %s1120
          %1123 = dma.vmem_to_hbm [thread:$0]  %s1121, 32, %s1118, [#allocation5]
        $region72: #{tpu_custom_call.1} parent=55 // pred_fallthru
          _
        // Predicated region
        $region73: #{tpu_custom_call.1} parent=55 // pred_check
          %p1124 = pneg %p284
        $region74: #{tpu_custom_call.1} parent=55 // pred_check_branch
          %1126 = sbr.rel (%p1124) target = $region76
        $region75: #{tpu_custom_call.1} parent=55 // pred_region
          %s1128 = ssub.s32 32, 32
          %1129 = vsyncadd [#allocation8], %s1128
          %s1130 = smul.addr %s31, 32
          %s1131 = scalar_lea.hbm %s10, %s1130
          %s1133 = sshll.u32 [#allocation7], 4
          %s1134 = int_to_ptr.vmem [resolvable:$true] %s1133
          %1136 = dma.vmem_to_hbm [thread:$0]  %s1134, 32, %s1131, [#allocation8]
        $region76: #{tpu_custom_call.1} parent=55 // pred_fallthru
          _
        // Predicated region
        $region77: #{tpu_custom_call.1} parent=55 // pred_check
          %p1137 = pneg %p258
        $region78: #{tpu_custom_call.1} parent=55 // pred_check_branch
          %1139 = sbr.rel (%p1137) target = $region80
        $region79: #{tpu_custom_call.1} parent=55 // pred_region
          %1140 = dma.done [#allocation5], 32
        $region80: #{tpu_custom_call.1} parent=55 // pred_fallthru
          _
        // Predicated region
        $region81: #{tpu_custom_call.1} parent=55 // pred_check
          %p1141 = pneg %p284
        $region82: #{tpu_custom_call.1} parent=55 // pred_check_branch
          %1143 = sbr.rel (%p1141) target = $region84
        $region83: #{tpu_custom_call.1} parent=55 // pred_region
          %1144 = dma.done [#allocation8], 32
        $region84: #{tpu_custom_call.1} parent=55 // pred_fallthru
          _
      $region56: #{tpu_custom_call.1} parent=5 // pred_fallthru
        _
      %p1145 = scmp.le.s32.totalorder 2, %s22
      // Predicated region
      $region85: #{tpu_custom_call.1} parent=5 // pred_check
        %p1146 = pneg %p1145
      $region86: #{tpu_custom_call.1} parent=5 // pred_check_branch
        %1148 = sbr.rel (%p1146) target = $region88
      $region87: #{tpu_custom_call.1} parent=5 // pred_region
        %s1149 = ssub.s32 %s22, 2
      $region88: #{tpu_custom_call.1} parent=5 // pred_fallthru
        _
    $region6: #{tpu_custom_call.1} parent=1 // loop_footer
      %s26 = sadd.s32 1, %s22
    $region7: #{tpu_custom_call.1} parent=1 // loop_footer_branch
      %21 = sbr.rel target = $region3
    $region8: #{tpu_custom_call.1} parent=1 // loop_exit
      _
    %1150 = vsyncpa [#allocation4], 1
    %s1151 = scalar_lea.sflag [#allocation4], 1
    %1152 = vsyncpa %s1151, 1
    %1153 = vsyncpa [#allocation5], 1
    %s1154 = scalar_lea.sflag [#allocation5], 1
    %1155 = vsyncpa %s1154, 1
    %1156 = vsyncpa [#allocation8], 1

</llo_original>
